<compile_context>
chip_gen: v5e
topology: v5e:2x2
jax: 0.10.0
libtpu: 0.0.40
codegen_flags: <defaults>
</compile_context>

<pallas_src>
import functools

import jax
import jax.numpy as jnp
from jax.experimental import pallas as pl
from jax.experimental.pallas import tpu as pltpu

_LANE = 1024     # lane-dense last dim, large multiple of 128
_TILE_R = 512    # row tile: 512 x 1024 f32 = 2 MiB per tile buffer


def _pact_quant_kernel(x_ref, o_ref, *, alpha, scale, inv_scale, dequantize):
    # Compute in f32 regardless of storage dtype (bf16 inputs are widened).
    x = x_ref[...].astype(jnp.float32)
    # PACT clipping: clamp to [0, alpha]
    # (matches input[input>=alpha]=alpha; input[input<=0]=0 in the reference).
    x = jnp.minimum(jnp.maximum(x, 0.0), alpha)
    # Linear quantize with zero_point == 0 (round-half-to-even, same as torch.round).
    q = jnp.round(x * scale)
    if dequantize:
        q = q * inv_scale          # multiply by precomputed 1/scale
    o_ref[...] = q.astype(o_ref.dtype)


def pact_quant(x, n_bits=2, alpha=10.0, dequantize=True):
    """PACT quantizer forward. Elementwise; works for any shape/float dtype."""
    orig_shape = x.shape
    total = x.size

    n_levels = 2 ** n_bits - 1
    scale = float(n_levels) / float(alpha)        # zero_point = round(scale*0) = 0
    inv_scale = float(alpha) / float(n_levels)

    # --- Flatten to a lane-dense slab (rows, _LANE), padding the tail. ---
    rows = -(-total // _LANE)                     # cdiv
    tile_r = min(_TILE_R, rows)                   # full-dim block if small
    rows_padded = -(-rows // tile_r) * tile_r     # make every row-tile full
    padded_total = rows_padded * _LANE

    x_flat = x.reshape(-1)
    if padded_total != total:
        x_flat = jnp.pad(x_flat, (0, padded_total - total))
    x2d = x_flat.reshape(rows_padded, _LANE)

    kernel = functools.partial(
        _pact_quant_kernel,
        alpha=float(alpha),
        scale=scale,
        inv_scale=inv_scale,
        dequantize=dequantize,
    )

    grid = (rows_padded // tile_r,)
    out2d = pl.pallas_call(
        kernel,
        out_shape=jax.ShapeDtypeStruct((rows_padded, _LANE), x.dtype),
        grid=grid,
        in_specs=[pl.BlockSpec((tile_r, _LANE), lambda i: (i, 0))],
        out_specs=pl.BlockSpec((tile_r, _LANE), lambda i: (i, 0)),
        compiler_params=pltpu.CompilerParams(
            dimension_semantics=("parallel",),    # no reduction; megacore-friendly
        ),
    )(x2d)

    # TODO(synk): inplace=True path (input_output_aliases) not implemented;
    # module default is inplace=False.
    return out2d.reshape(-1)[:total].reshape(orig_shape)


def pact_quant_ref(x, n_bits=2, alpha=10.0, dequantize=True):
    """Pure-JAX reference mirroring the PyTorch module."""
    xf = jnp.clip(x.astype(jnp.float32), 0.0, alpha)
    scale = (2 ** n_bits - 1) / alpha
    q = jnp.round(xf * scale)
    out = q / scale if dequantize else q
    return out.astype(x.dtype)


if __name__ == "__main__":
    key = jax.random.PRNGKey(0)
    k0, k1 = jax.random.split(key)

    # Main test: NCHW activation tensor with negative, in-range, and > alpha
    # values so both clamp paths are exercised.
    x = jax.random.uniform(k0, (2, 4, 16, 16), dtype=jnp.float32,
                           minval=-3.0, maxval=13.0)
    out = pact_quant(x, n_bits=2, alpha=10.0, dequantize=True)
    out = jax.block_until_ready(out)
    ref = pact_quant_ref(x, n_bits=2, alpha=10.0, dequantize=True)
    assert out.shape == x.shape and out.dtype == x.dtype
    assert jnp.allclose(out, ref, rtol=1e-6, atol=1e-5), "mismatch vs reference"

    # Odd spatial size (14x14 -> flat length not a multiple of 1024) to hit the
    # lane-padding path.
    x2 = jax.random.uniform(k1, (2, 4, 14, 14), dtype=jnp.float32,
                            minval=-3.0, maxval=13.0)
    out2 = jax.block_until_ready(pact_quant(x2))
    ref2 = pact_quant_ref(x2)
    assert out2.shape == x2.shape and out2.dtype == x2.dtype
    assert jnp.allclose(out2, ref2, rtol=1e-6, atol=1e-5), "mismatch (padded path)"

    print("KERNEL_OK")
</pallas_src>

<mosaic_0001>
module attributes {stable_mosaic.version = 11 : i64} {
  func.func @_pact_quant_kernel(%arg0: i32, %arg1: memref<2x1024xf32, #tpu.memory_space<vmem>>, %arg2: memref<2x1024xf32, #tpu.memory_space<vmem>>) attributes {dimension_semantics = [#tpu.dimension_semantics<parallel>], iteration_bounds = array<i64: 1>, scalar_prefetch = 0 : i64, scratch_operands = 0 : i64, tpu.core_type = #tpu.core_type<tc>, window_params = [{transform_indices = @transform_0, window_bounds = array<i64: 2, 1024>}, {transform_indices = @transform_1, window_bounds = array<i64: 2, 1024>}]} {
    %c0 = arith.constant 0 : index
    %c0_0 = arith.constant 0 : index
    %0 = vector.load %arg1[%c0, %c0_0] : memref<2x1024xf32, #tpu.memory_space<vmem>>, vector<2x1024xf32>
    %cst = arith.constant 0.000000e+00 : f32
    %1 = vector.broadcast %cst : f32 to vector<2x1024xf32>
    %2 = arith.maximumf %0, %1 : vector<2x1024xf32>
    %cst_1 = arith.constant 1.000000e+01 : f32
    %3 = vector.broadcast %cst_1 : f32 to vector<2x1024xf32>
    %4 = arith.minimumf %2, %3 : vector<2x1024xf32>
    %cst_2 = arith.constant 3.000000e-01 : f32
    %5 = vector.broadcast %cst_2 : f32 to vector<2x1024xf32>
    %6 = arith.mulf %4, %5 : vector<2x1024xf32>
    %7 = math.roundeven %6 : vector<2x1024xf32>
    %cst_3 = arith.constant 3.33333325 : f32
    %8 = vector.broadcast %cst_3 : f32 to vector<2x1024xf32>
    %9 = arith.mulf %7, %8 : vector<2x1024xf32>
    %c0_4 = arith.constant 0 : index
    %c0_5 = arith.constant 0 : index
    %10 = vector.load %arg2[%c0_4, %c0_5] : memref<2x1024xf32, #tpu.memory_space<vmem>>, vector<2x1024xf32>
    tpu.vector_store %arg2[%c0_4, %c0_5], %9 {strides = array<i32>} : memref<2x1024xf32, #tpu.memory_space<vmem>>, vector<2x1024xf32>,
    return
  }
  func.func @transform_0(%arg0: i32) -> (i32, i32) {
    %c0_i32 = arith.constant 0 : i32
    %c0_i32_0 = arith.constant 0 : i32
    return %arg0, %c0_i32 : i32, i32
  }
  func.func @transform_1(%arg0: i32) -> (i32, i32) {
    %c0_i32 = arith.constant 0 : i32
    %c0_i32_0 = arith.constant 0 : i32
    return %arg0, %c0_i32 : i32, i32
  }
}

</mosaic_0001>

<llo_original>
// kernel: tpu_custom_call.1
$region0: #{tpu_custom_call.1}
  #allocation0 [shape = 'u32[]', space=smem, size = 0x4, offset = 0x4, fixed_abs, tag = 'smem constant byte address 0x4 - core index']
  #allocation1 [shape = 'u32[72,128]{1,0:T(1,128)}', space=vmem, size = 0x9000, scoped, tag = 'internal scratch']
  %s0 = inlined_call_operand.hbm [shape: f32[2,1024], index: 0, kind: input, shape index: {}]
  %s1 = inlined_call_operand.hbm [shape: f32[2,1024], index: 1, kind: output, shape index: {}]
  %s2 = sld [smem:[#allocation0]]
  $region18: #{tpu_custom_call.1} parent=0
    _
  %s4 = ssub.s32 1, %s2
  %s5 = scalar_select 0, %s4, %s2
  $region1: #{tpu_custom_call.1} parent=0
    #allocation2 [shape = 'u8[8192]{0}', space=vmem, size = 0x2000, scoped, tag = 'input window, operand 0, single buffered']
    #allocation3 [shape = 's32[1]{0}', space=sflag, size = 0x4, scoped, tag = 'scoped memory for tpu_custom_call.1']
    #allocation4 [shape = 's32[1]{0}', space=sflag, size = 0x4, scoped, tag = 'scoped memory for tpu_custom_call.1']
    #allocation5 [shape = 'u8[8192]{0}', space=vmem, size = 0x2000, scoped, tag = 'output window, operand 0, single buffered']
    %6 = vsyncpa [#allocation3], 0
    %7 = vsyncpa [#allocation4], 0
    // Predicated region
    $region2: #{tpu_custom_call.1} parent=1 // pred_check
      _
    $region3: #{tpu_custom_call.1} parent=1 // pred_check_branch
      %9 = sbr.rel (0) target = $region5
    $region4: #{tpu_custom_call.1} parent=1 // pred_region
      %11 = vsyncadd [#allocation3], 0
      %s13 = sshll.u32 %s0, 4
      %s14 = int_to_ptr.hbm [resolvable:$true] %s13
      %s15 = sshll.u32 [#allocation2], 4
      %s16 = int_to_ptr.vmem [resolvable:$true] %s15
      %18 = dma.hbm_to_vmem [thread:$0]  %s14, 256, %s16, [#allocation3]
    $region5: #{tpu_custom_call.1} parent=1 // pred_fallthru
      _
    // Predicated region
    $region6: #{tpu_custom_call.1} parent=1 // pred_check
      _
    $region7: #{tpu_custom_call.1} parent=1 // pred_check_branch
      %20 = sbr.rel (0) target = $region9
    $region8: #{tpu_custom_call.1} parent=1 // pred_region
      %22 = dma.done [#allocation3], 256
    $region9: #{tpu_custom_call.1} parent=1 // pred_fallthru
      _
    %v23 = vld [vmem:[#allocation2] sm:$0xff]
    %v24 = vld [vmem:[#allocation2 + $0x8] sm:$0xff]
    %v25 = vmax.f32 %v23, 0.0
    %v26 = vmax.f32 %v24, 0.0
    %v27 = vmin.f32 %v25, 10.0
    %v28 = vmin.f32 %v26, 10.0
    %v29 = vmul.f32 %v27, 0.3
    %v30 = vmul.f32 %v28, 0.3
    %v31 = vround.ne.pseudo %v29
    %v32 = vround.ne.pseudo %v30
    %v33 = vmul.f32 %v31, 3.3333333
    %v34 = vmul.f32 %v32, 3.3333333
    %35 = vst [vmem:[#allocation5] sm:$0xff] %v33
    %36 = vst [vmem:[#allocation5 + $0x8] sm:$0xff] %v34
    // Predicated region
    $region10: #{tpu_custom_call.1} parent=1 // pred_check
      _
    $region11: #{tpu_custom_call.1} parent=1 // pred_check_branch
      %38 = sbr.rel (0) target = $region13
    $region12: #{tpu_custom_call.1} parent=1 // pred_region
      %40 = vsyncadd [#allocation4], 0
      %s42 = sshll.u32 [#allocation5], 4
      %s43 = int_to_ptr.vmem [resolvable:$true] %s42
      %s44 = sshll.u32 %s1, 4
      %s45 = int_to_ptr.hbm [resolvable:$true] %s44
      %47 = dma.vmem_to_hbm [thread:$0]  %s43, 256, %s45, [#allocation4]
    $region13: #{tpu_custom_call.1} parent=1 // pred_fallthru
      _
    // Predicated region
    $region14: #{tpu_custom_call.1} parent=1 // pred_check
      _
    $region15: #{tpu_custom_call.1} parent=1 // pred_check_branch
      %49 = sbr.rel (0) target = $region17
    $region16: #{tpu_custom_call.1} parent=1 // pred_region
      %51 = dma.done [#allocation4], 256
    $region17: #{tpu_custom_call.1} parent=1 // pred_fallthru
      _
    %52 = vsyncpa [#allocation3], 1
    %53 = vsyncpa [#allocation4], 1

</llo_original>
